<compile_context>
chip_gen: v5e
topology: v5e:2x2
jax: 0.10.0
libtpu: 0.0.40
codegen_flags: <defaults>
</compile_context>

<pallas_src>
import functools

import jax
import jax.numpy as jnp
from jax.experimental import pallas as pl
from jax.experimental.pallas import tpu as pltpu


# ----------------------------------------------------------------------------
# Pallas kernel: per-point linear projection on a sublane+lane-dense tile
# ----------------------------------------------------------------------------
def traffic_kernel(x_ref, w_ref, b_ref, o_ref):
    # x_ref: (D_in,  8, TM8) f32 in VMEM   (M folded onto sublanes + lanes)
    # w_ref: (D_in * D_out,) f32 in SMEM   (row-major w[k, d])
    # b_ref: (D_out,)        f32 in SMEM
    # o_ref: (D_out, 8, TM8) f32 in VMEM
    d_in = x_ref.shape[0]
    d_out = o_ref.shape[0]

    # Hoist the tiny SMEM scalar reads out of the unrolled FMA loops.
    w = [[w_ref[k * d_out + d] for d in range(d_out)] for k in range(d_in)]
    b = [b_ref[d] for d in range(d_out)]

    # y[d] = sum_k x[k] * w[k, d] + b[d]   — pure VPU broadcast-FMAs on an
    # (8, TM8) slab per row; per-row reads keep live ranges one strip wide.
    for d in range(d_out):
        acc = x_ref[0] * w[0][d]
        for k in range(1, d_in):
            acc = acc + x_ref[k] * w[k][d]
        o_ref[d] = acc + b[d]


# ----------------------------------------------------------------------------
# Wrapper: slice base features, fold M onto sublanes+lanes, tile over M
# ----------------------------------------------------------------------------
def _pick_tile(m, tm_max):
    """Points per grid step: a multiple of 1024 (so tm/8 is a multiple of 128),
    capped at tm_max, aiming for >= 4 grid steps when M is large enough."""
    tm = -(-m // 4)                      # cdiv(M, 4): target >= 4 steps
    tm = -(-tm // 1024) * 1024           # round up to a multiple of 1024
    return int(max(1024, min(tm_max, tm)))


@functools.partial(
    jax.jit, static_argnames=("input_base_dim", "output_dim", "tm_max"))
def traffic_model_forward(source, w, b, *, input_base_dim, output_dim,
                          tm_max=131072):
    """source: (B, T, N, D_total) f32 -> (B, T, N, output_dim) f32."""
    B, T, N, _ = source.shape
    M = B * T * N

    tm = _pick_tile(M, tm_max)           # points per grid step (mult. of 1024)
    m_pad = -(-M // tm) * tm             # pad M up to a multiple of tm
    tm8 = tm // 8
    m8 = m_pad // 8

    # forward(): source[..., 0:input_base_dim], then relayout to a
    # sublane+lane-dense (D_in, 8, m_pad/8) slab.  Under jit the slice,
    # transpose, pad and reshape fuse into a single pre-copy.
    x = source[..., 0:input_base_dim].astype(jnp.float32)
    x = x.reshape(M, input_base_dim).T                      # (D_in, M)
    if m_pad != M:
        x = jnp.pad(x, ((0, 0), (0, m_pad - M)))
    x = x.reshape(input_base_dim, 8, m8)                    # free row-major view

    w_flat = jnp.asarray(w, jnp.float32).reshape(input_base_dim * output_dim)
    b_flat = jnp.asarray(b, jnp.float32).reshape(output_dim)

    cost = pl.CostEstimate(
        flops=2 * M * input_base_dim * output_dim,
        transcendentals=0,
        bytes_accessed=M * (input_base_dim + output_dim) * 4,
    )

    out = pl.pallas_call(
        traffic_kernel,
        out_shape=jax.ShapeDtypeStruct((output_dim, 8, m8), jnp.float32),
        grid=(m_pad // tm,),
        in_specs=[
            # Full-sublane, lane-dense input tile.
            pl.BlockSpec((input_base_dim, 8, tm8), lambda i: (0, 0, i)),
            # Tiny weights / bias: whole arrays resident in SMEM.
            pl.BlockSpec(memory_space=pltpu.MemorySpace.SMEM),
            pl.BlockSpec(memory_space=pltpu.MemorySpace.SMEM),
        ],
        out_specs=pl.BlockSpec((output_dim, 8, tm8), lambda i: (0, 0, i)),
        compiler_params=pltpu.CompilerParams(
            dimension_semantics=("parallel",),   # shard tiles across TCs (v7x)
        ),
        cost_estimate=cost,
    )(x, w_flat, b_flat)

    # Undo the fold (fuses with the pallas output into one post-copy under jit).
    out = out.reshape(output_dim, m_pad)[:, :M].T
    return out.reshape(B, T, N, output_dim)


if __name__ == "__main__":
    # Small shapes consistent with the module's forward signature; N=256 gives
    # M=4096 so the grid has 4 steps (pipelining / dual-TC path is exercised).
    B, T, N = 2, 8, 256         # batch, time steps, nodes
    input_base_dim = 2          # args.input_base_dim
    input_extra_dim = 2         # args.input_extra_dim
    output_dim = 2              # args.output_dim
    D_total = input_base_dim + input_extra_dim

    key = jax.random.PRNGKey(0)
    k_src, k_w, k_b = jax.random.split(key, 3)

    source = jax.random.normal(k_src, (B, T, N, D_total), dtype=jnp.float32)
    # Deterministic synthetic predictor parameters.
    w = jax.random.normal(k_w, (input_base_dim, output_dim), dtype=jnp.float32) * 0.1
    b = jax.random.normal(k_b, (output_dim,), dtype=jnp.float32) * 0.01

    out = traffic_model_forward(
        source, w, b, input_base_dim=input_base_dim, output_dim=output_dim)
    out = jax.block_until_ready(out)

    # Reference check (pure JAX) of the exact same semantics.
    ref = source[..., 0:input_base_dim] @ w + b
    assert out.shape == (B, T, N, output_dim)
    assert jnp.allclose(out, ref, atol=1e-5, rtol=1e-5)

    print("KERNEL_OK")
</pallas_src>

<mosaic_0001>
module attributes {stable_mosaic.version = 11 : i64} {
  func.func @traffic_kernel(%arg0: i32, %arg1: memref<2x8x128xf32, #tpu.memory_space<vmem>>, %arg2: memref<4xf32, #tpu.memory_space<smem>>, %arg3: memref<2xf32, #tpu.memory_space<smem>>, %arg4: memref<2x8x128xf32, #tpu.memory_space<vmem>>) attributes {dimension_semantics = [#tpu.dimension_semantics<parallel>], iteration_bounds = array<i64: 4>, scalar_prefetch = 0 : i64, scratch_operands = 0 : i64, tpu.core_type = #tpu.core_type<tc>, window_params = [{transform_indices = @transform_0, window_bounds = array<i64: 2, 8, 128>}, {transform_indices = @transform_1, window_bounds = array<i64: 4>}, {transform_indices = @transform_2, window_bounds = array<i64: 2>}, {transform_indices = @transform_3, window_bounds = array<i64: 2, 8, 128>}]} {
    %c0 = arith.constant 0 : index
    %0 = memref.load %arg2[%c0] : memref<4xf32, #tpu.memory_space<smem>>
    %c1 = arith.constant 1 : index
    %1 = memref.load %arg2[%c1] : memref<4xf32, #tpu.memory_space<smem>>
    %c2 = arith.constant 2 : index
    %2 = memref.load %arg2[%c2] : memref<4xf32, #tpu.memory_space<smem>>
    %c3 = arith.constant 3 : index
    %3 = memref.load %arg2[%c3] : memref<4xf32, #tpu.memory_space<smem>>
    %c0_0 = arith.constant 0 : index
    %4 = memref.load %arg3[%c0_0] : memref<2xf32, #tpu.memory_space<smem>>
    %c1_1 = arith.constant 1 : index
    %5 = memref.load %arg3[%c1_1] : memref<2xf32, #tpu.memory_space<smem>>
    %c0_2 = arith.constant 0 : index
    %c0_3 = arith.constant 0 : index
    %c0_4 = arith.constant 0 : index
    %6 = vector.load %arg1[%c0_2, %c0_3, %c0_4] : memref<2x8x128xf32, #tpu.memory_space<vmem>>, vector<1x8x128xf32>
    %7 = vector.shape_cast %6 : vector<1x8x128xf32> to vector<8x128xf32>
    %8 = vector.broadcast %0 : f32 to vector<8x128xf32>
    %9 = arith.mulf %7, %8 : vector<8x128xf32>
    %c1_5 = arith.constant 1 : index
    %c0_6 = arith.constant 0 : index
    %c0_7 = arith.constant 0 : index
    %10 = vector.load %arg1[%c1_5, %c0_6, %c0_7] : memref<2x8x128xf32, #tpu.memory_space<vmem>>, vector<1x8x128xf32>
    %11 = vector.shape_cast %10 : vector<1x8x128xf32> to vector<8x128xf32>
    %12 = vector.broadcast %2 : f32 to vector<8x128xf32>
    %13 = arith.mulf %11, %12 : vector<8x128xf32>
    %14 = arith.addf %9, %13 : vector<8x128xf32>
    %15 = vector.broadcast %4 : f32 to vector<8x128xf32>
    %16 = arith.addf %14, %15 : vector<8x128xf32>
    %c0_8 = arith.constant 0 : index
    %c0_9 = arith.constant 0 : index
    %c0_10 = arith.constant 0 : index
    %17 = vector.load %arg4[%c0_8, %c0_9, %c0_10] : memref<2x8x128xf32, #tpu.memory_space<vmem>>, vector<1x8x128xf32>
    %18 = vector.shape_cast %17 : vector<1x8x128xf32> to vector<8x128xf32>
    %19 = vector.shape_cast %16 : vector<8x128xf32> to vector<1x8x128xf32>
    tpu.vector_store %arg4[%c0_8, %c0_9, %c0_10], %19 {strides = array<i32>} : memref<2x8x128xf32, #tpu.memory_space<vmem>>, vector<1x8x128xf32>,
    %c0_11 = arith.constant 0 : index
    %c0_12 = arith.constant 0 : index
    %c0_13 = arith.constant 0 : index
    %20 = vector.load %arg1[%c0_11, %c0_12, %c0_13] : memref<2x8x128xf32, #tpu.memory_space<vmem>>, vector<1x8x128xf32>
    %21 = vector.shape_cast %20 : vector<1x8x128xf32> to vector<8x128xf32>
    %22 = vector.broadcast %1 : f32 to vector<8x128xf32>
    %23 = arith.mulf %21, %22 : vector<8x128xf32>
    %c1_14 = arith.constant 1 : index
    %c0_15 = arith.constant 0 : index
    %c0_16 = arith.constant 0 : index
    %24 = vector.load %arg1[%c1_14, %c0_15, %c0_16] : memref<2x8x128xf32, #tpu.memory_space<vmem>>, vector<1x8x128xf32>
    %25 = vector.shape_cast %24 : vector<1x8x128xf32> to vector<8x128xf32>
    %26 = vector.broadcast %3 : f32 to vector<8x128xf32>
    %27 = arith.mulf %25, %26 : vector<8x128xf32>
    %28 = arith.addf %23, %27 : vector<8x128xf32>
    %29 = vector.broadcast %5 : f32 to vector<8x128xf32>
    %30 = arith.addf %28, %29 : vector<8x128xf32>
    %c1_17 = arith.constant 1 : index
    %c0_18 = arith.constant 0 : index
    %c0_19 = arith.constant 0 : index
    %31 = vector.load %arg4[%c1_17, %c0_18, %c0_19] : memref<2x8x128xf32, #tpu.memory_space<vmem>>, vector<1x8x128xf32>
    %32 = vector.shape_cast %31 : vector<1x8x128xf32> to vector<8x128xf32>
    %33 = vector.shape_cast %30 : vector<8x128xf32> to vector<1x8x128xf32>
    tpu.vector_store %arg4[%c1_17, %c0_18, %c0_19], %33 {strides = array<i32>} : memref<2x8x128xf32, #tpu.memory_space<vmem>>, vector<1x8x128xf32>,
    return
  }
  func.func @transform_0(%arg0: i32) -> (i32, i32, i32) {
    %c0_i32 = arith.constant 0 : i32
    %c0_i32_0 = arith.constant 0 : i32
    %c0_i32_1 = arith.constant 0 : i32
    return %c0_i32, %c0_i32_0, %arg0 : i32, i32, i32
  }
  func.func @transform_1(%arg0: i32) -> i32 {
    %c0_i32 = arith.constant 0 : i32
    %c0_i32_0 = arith.constant 0 : i32
    return %c0_i32 : i32
  }
  func.func @transform_2(%arg0: i32) -> i32 {
    %c0_i32 = arith.constant 0 : i32
    %c0_i32_0 = arith.constant 0 : i32
    return %c0_i32 : i32
  }
  func.func @transform_3(%arg0: i32) -> (i32, i32, i32) {
    %c0_i32 = arith.constant 0 : i32
    %c0_i32_0 = arith.constant 0 : i32
    %c0_i32_1 = arith.constant 0 : i32
    return %c0_i32, %c0_i32_0, %arg0 : i32, i32, i32
  }
}

</mosaic_0001>

<llo_original>
// kernel: traffic_model_forward.1
$region0: #{traffic_model_forward.1}
  #allocation0 [shape = 'u32[]', space=smem, size = 0x4, offset = 0x4, fixed_abs, tag = 'smem constant byte address 0x4 - core index']
  #allocation1 [shape = 'u32[72,128]{1,0:T(1,128)}', space=vmem, size = 0x9000, scoped, tag = 'internal scratch']
  %s0 = inlined_call_operand.vmem [shape: f32[2,8,512], index: 0, kind: input, shape index: {}]
  %s1 = inlined_call_operand.vmem [shape: f32[4], index: 1, kind: input, shape index: {}]
  %s2 = inlined_call_operand.vmem [shape: f32[2], index: 2, kind: input, shape index: {}]
  %s3 = inlined_call_operand.vmem [shape: f32[2,8,512], index: 3, kind: output, shape index: {}]
  %s4 = sld [smem:[#allocation0]]
  $region125: #{traffic_model_forward.1} parent=0
    _
  %s6 = ssub.s32 1, %s4
  %s7 = scalar_select 0, %s6, %s4
  $region1: #{traffic_model_forward.1} parent=0
    #allocation2 [shape = 'u8[16384]{0}', space=vmem, size = 0x4000, scoped, tag = 'input window, operand 0']
    #allocation3 [shape = 'u8[512]{0}', space=smem, size = 0x200, scoped, tag = 'input window, operand 1, single buffered']
    #allocation4 [shape = 's32[2]{0}', space=sflag, size = 0x8, scoped, tag = 'scoped memory for traffic_model_forward.1']
    #allocation5 [shape = 'u8[512]{0}', space=smem, size = 0x200, scoped, tag = 'input window, operand 2, single buffered']
    #allocation6 [shape = 's32[1]{0}', space=sflag, size = 0x4, scoped, tag = 'scoped memory for traffic_model_forward.1']
    #allocation7 [shape = 'u8[16384]{0}', space=vmem, size = 0x4000, scoped, tag = 'output window, operand 0']
    %8 = vsyncpa [#allocation4], 0
    %9 = vsyncpa [#allocation6], 0
    loop: start=0, step=1, limit=6
    $region2: #{traffic_model_forward.1} parent=1 // loop_pre_header
      _
    $region3: #{traffic_model_forward.1} parent=1 // loop_header
      %s11 = sphi 0, %s15
      %p12 = scmp.ge.s32.totalorder %s11, 6
      %s21 = sphi 0, %s23
      %s24 = sphi 0, %s21
      %s25 = sphi 0, %s24
      %s41 = sphi 0, %s25
      %s45 = sphi 0, %s45
      %s47 = sphi 0, %s45
      %s48 = sphi 0, %s47
      %s62 = sphi 0, %s48
      %s66 = sphi 0, %s66
      %s68 = sphi 0, %s66
      %s69 = sphi 0, %s68
      %s83 = sphi 0, %s69
      %s89 = sphi 0, %s91
      %s92 = sphi 0, %s89
      %s93 = sphi 0, %s92
      %s109 = sphi 0, %s93
    $region4: #{traffic_model_forward.1} parent=1 // loop_header_branch
      %14 = sbr.rel (%p12) target = $region8
    $region5: #{traffic_model_forward.1} parent=1 // loop_body
      %s16 = ssub.s32 %s11, 1
      %s17 = ssub.s32 %s11, 2
      %s18 = sadd.s32 %s11, 1
      %s19 = ssub.s32 %s11, %s18
      %p20 = scmp.eq.s32.totalorder %s19, 0
      %s22 = sadd.s32 %s21, 1
      %s23 = scalar_select %p20, %s21, %s22
      %p26 = pneg %p20
      %p27 = scmp.eq.s32.totalorder %s11, 3
      %p28 = por %p26, %p27
      %p29 = scmp.ne.s32.totalorder %s21, %s24
      %p30 = scmp.eq.s32.totalorder %s11, 0
      %p31 = por %p29, %p30
      %p32 = scmp.ne.s32.totalorder %s21, %s24
      %p33 = scmp.eq.s32.totalorder %s16, 3
      %p34 = por %p32, %p33
      %p35 = scmp.ne.s32.totalorder %s24, %s25
      %p36 = scmp.eq.s32.totalorder %s16, 0
      %p37 = por %p35, %p36
      %p38 = scmp.ne.s32.totalorder %s24, %s25
      %p39 = scmp.eq.s32.totalorder %s17, 3
      %p40 = por %p38, %p39
      %p42 = scmp.ne.s32.totalorder %s25, %s41
      %p43 = scmp.eq.s32.totalorder %s17, 0
      %p44 = por %p42, %p43
      %s46 = sadd.s32 %s45, 1
      %p49 = scmp.eq.s32.totalorder %s11, 3
      %p50 = scmp.ne.s32.totalorder %s45, %s47
      %p51 = scmp.eq.s32.totalorder %s11, 0
      %p52 = por %p50, %p51
      %p53 = scmp.ne.s32.totalorder %s45, %s47
      %p54 = scmp.eq.s32.totalorder %s16, 3
      %p55 = por %p53, %p54
      %p56 = scmp.ne.s32.totalorder %s47, %s48
      %p57 = scmp.eq.s32.totalorder %s16, 0
      %p58 = por %p56, %p57
      %p59 = scmp.ne.s32.totalorder %s47, %s48
      %p60 = scmp.eq.s32.totalorder %s17, 3
      %p61 = por %p59, %p60
      %p63 = scmp.ne.s32.totalorder %s48, %s62
      %p64 = scmp.eq.s32.totalorder %s17, 0
      %p65 = por %p63, %p64
      %s67 = sadd.s32 %s66, 1
      %p70 = scmp.eq.s32.totalorder %s11, 3
      %p71 = scmp.ne.s32.totalorder %s66, %s68
      %p72 = scmp.eq.s32.totalorder %s11, 0
      %p73 = por %p71, %p72
      %p74 = scmp.ne.s32.totalorder %s66, %s68
      %p75 = scmp.eq.s32.totalorder %s16, 3
      %p76 = por %p74, %p75
      %p77 = scmp.ne.s32.totalorder %s68, %s69
      %p78 = scmp.eq.s32.totalorder %s16, 0
      %p79 = por %p77, %p78
      %p80 = scmp.ne.s32.totalorder %s68, %s69
      %p81 = scmp.eq.s32.totalorder %s17, 3
      %p82 = por %p80, %p81
      %p84 = scmp.ne.s32.totalorder %s69, %s83
      %p85 = scmp.eq.s32.totalorder %s17, 0
      %p86 = por %p84, %p85
      %s87 = ssub.s32 %s11, %s18
      %p88 = scmp.eq.s32.totalorder %s87, 0
      %s90 = sadd.s32 %s89, 1
      %s91 = scalar_select %p88, %s89, %s90
      %p94 = pneg %p88
      %p95 = scmp.eq.s32.totalorder %s11, 3
      %p96 = por %p94, %p95
      %p97 = scmp.ne.s32.totalorder %s89, %s92
      %p98 = scmp.eq.s32.totalorder %s11, 0
      %p99 = por %p97, %p98
      %p100 = scmp.ne.s32.totalorder %s89, %s92
      %p101 = scmp.eq.s32.totalorder %s16, 3
      %p102 = por %p100, %p101
      %p103 = scmp.ne.s32.totalorder %s92, %s93
      %p104 = scmp.eq.s32.totalorder %s16, 0
      %p105 = por %p103, %p104
      %p106 = scmp.ne.s32.totalorder %s92, %s93
      %p107 = scmp.eq.s32.totalorder %s17, 3
      %p108 = por %p106, %p107
      %p110 = scmp.ne.s32.totalorder %s93, %s109
      %p111 = scmp.eq.s32.totalorder %s17, 0
      %p112 = por %p110, %p111
      %p113 = scmp.le.s32.totalorder 1, %s11
      %p114 = scmp.lt.s32.totalorder %s11, 5
      %p115 = pnand %p113, %p114
      %p116 = pneg %p115
      // Predicated region
      $region9: #{traffic_model_forward.1} parent=5 // pred_check
        _
      $region10: #{traffic_model_forward.1} parent=5 // pred_check_branch
        %118 = sbr.rel (%p115) target = $region12
      $region11: #{traffic_model_forward.1} parent=5 // pred_region
        %s119 = ssub.s32 %s11, 1
        // Predicated region
        $region13: #{traffic_model_forward.1} parent=11 // pred_check
          %p120 = pneg %p58
        $region14: #{traffic_model_forward.1} parent=11 // pred_check_branch
          %122 = sbr.rel (%p120) target = $region16
        $region15: #{traffic_model_forward.1} parent=11 // pred_region
          %124 = vsyncadd [#allocation4], 0
          %s126 = sshll.u32 %s1, 4
          %s127 = int_to_ptr.vmem [resolvable:$true] %s126
          %129 = dma.vmem_to_smem %s127, 16, [#allocation3], [#allocation4]
        $region16: #{traffic_model_forward.1} parent=11 // pred_fallthru
          _
        // Predicated region
        $region17: #{traffic_model_forward.1} parent=11 // pred_check
          %p130 = pneg %p79
        $region18: #{traffic_model_forward.1} parent=11 // pred_check_branch
          %132 = sbr.rel (%p130) target = $region20
        $region19: #{traffic_model_forward.1} parent=11 // pred_region
          %134 = vsyncadd [#allocation6], 0
          %s136 = sshll.u32 %s2, 4
          %s137 = int_to_ptr.vmem [resolvable:$true] %s136
          %139 = dma.vmem_to_smem %s137, 16, [#allocation5], [#allocation6]
        $region20: #{traffic_model_forward.1} parent=11 // pred_fallthru
          _
      $region12: #{traffic_model_forward.1} parent=5 // pred_fallthru
        _
      %p140 = scmp.lt.s32.totalorder %s11, 4
      // Predicated region
      $region21: #{traffic_model_forward.1} parent=5 // pred_check
        %p141 = pneg %p140
      $region22: #{traffic_model_forward.1} parent=5 // pred_check_branch
        %143 = sbr.rel (%p141) target = $region24
      $region23: #{traffic_model_forward.1} parent=5 // pred_region
        // Predicated region
        $region25: #{traffic_model_forward.1} parent=23 // pred_check
          %p144 = pneg %p31
        $region26: #{traffic_model_forward.1} parent=23 // pred_check_branch
          %146 = sbr.rel (%p144) target = $region28
        $region27: #{traffic_model_forward.1} parent=23 // pred_region
          %s147 = sand.u32 %s21, 1
          %s148 = sand.u32 %s21, 1
          %s149 = smul.addr %s148, 16
          %s150 = scalar_lea.vmem [#allocation2], %s149
          %s151 = smul.addr %s11, 8
          %s152 = scalar_lea.vmem %s0, %s151
          // Predicated region
          $region29: #{traffic_model_forward.1} parent=27 // pred_check
            _
          $region30: #{traffic_model_forward.1} parent=27 // pred_check_branch
            %154 = sbr.rel (0) target = $region32
          $region31: #{traffic_model_forward.1} parent=27 // pred_region
            // Predicated region
            $region33: #{traffic_model_forward.1} parent=31 // pred_check
              _
            $region34: #{traffic_model_forward.1} parent=31 // pred_check_branch
              %156 = sbr.rel (0) target = $region36
            $region35: #{traffic_model_forward.1} parent=31 // pred_region
              // Predicated region
              $region48: #{traffic_model_forward.1} parent=35 // pred_check
                _
              $region49: #{traffic_model_forward.1} parent=35 // pred_check_branch
                %174 = sbr.rel (0) target = $region51
              $region50: #{traffic_model_forward.1} parent=35 // pred_region
                loop: start=0, step=1, limit=1
                $region52: #{traffic_model_forward.1} parent=50 // loop_pre_header
                  _
                $region53: #{traffic_model_forward.1} parent=50 // loop_header
                  %s176 = sphi 0, %s180
                  %p177 = scmp.ge.s32.totalorder %s176, 1
                  %s181 = sphi %s152, %s152
                  %s182 = sphi %s150, %s150
                $region54: #{traffic_model_forward.1} parent=50 // loop_header_branch
                  %179 = sbr.rel (%p177) target = $region58
                $region55: #{traffic_model_forward.1} parent=50 // loop_body
                  %v183 = vld [vmem:[%s181] sm:$0xff]
                  %184 = vst [vmem:[%s182] sm:$0xff] %v183
                  %v185 = vld [vmem:[%s181 + $0x20] sm:$0xff]
                  %186 = vst [vmem:[%s182 + $0x8] sm:$0xff] %v185
                $region56: #{traffic_model_forward.1} parent=50 // loop_footer
                  %s180 = sadd.s32 1, %s176
                $region57: #{traffic_model_forward.1} parent=50 // loop_footer_branch
                  %175 = sbr.rel target = $region53
                $region58: #{traffic_model_forward.1} parent=50 // loop_exit
                  _
              $region51: #{traffic_model_forward.1} parent=35 // pred_fallthru
                _
              // Predicated region
              $region59: #{traffic_model_forward.1} parent=35 // pred_check
                _
              $region60: #{traffic_model_forward.1} parent=35 // pred_check_branch
                %188 = sbr.rel target = $region62
              $region61: #{traffic_model_forward.1} parent=35 // pred_region
                _
              $region62: #{traffic_model_forward.1} parent=35 // pred_fallthru
                _
            $region36: #{traffic_model_forward.1} parent=31 // pred_fallthru
              _
            // Predicated region
            $region37: #{traffic_model_forward.1} parent=31 // pred_check
              _
            $region38: #{traffic_model_forward.1} parent=31 // pred_check_branch
              %158 = sbr.rel target = $region40
            $region39: #{traffic_model_forward.1} parent=31 // pred_region
              %s160 = ssub.s32 256, 1
              loop: start=0, step=1, limit=1
              $region41: #{traffic_model_forward.1} parent=39 // loop_pre_header
                _
              $region42: #{traffic_model_forward.1} parent=39 // loop_header
                %s162 = sphi 0, %s166
                %p163 = scmp.ge.s32.totalorder %s162, 1
                %s167 = sphi %s152, %s152
                %s168 = sphi %s150, %s150
              $region43: #{traffic_model_forward.1} parent=39 // loop_header_branch
                %165 = sbr.rel (%p163) target = $region47
              $region44: #{traffic_model_forward.1} parent=39 // loop_body
                %v169 = vld [vmem:[%s167] sm:%s160]
                %170 = vst [vmem:[%s168] sm:%s160] %v169
                %v171 = vld [vmem:[%s167 + $0x20] sm:%s160]
                %172 = vst [vmem:[%s168 + $0x8] sm:%s160] %v171
              $region45: #{traffic_model_forward.1} parent=39 // loop_footer
                %s166 = sadd.s32 1, %s162
              $region46: #{traffic_model_forward.1} parent=39 // loop_footer_branch
                %161 = sbr.rel target = $region42
              $region47: #{traffic_model_forward.1} parent=39 // loop_exit
                _
            $region40: #{traffic_model_forward.1} parent=31 // pred_fallthru
              _
          $region32: #{traffic_model_forward.1} parent=27 // pred_fallthru
            _
          %189 = vnop
        $region28: #{traffic_model_forward.1} parent=23 // pred_fallthru
          _
      $region24: #{traffic_model_forward.1} parent=5 // pred_fallthru
        _
      %p190 = scmp.le.s32.totalorder 1, %s11
      %p191 = scmp.lt.s32.totalorder %s11, 5
      %p192 = pnand %p190, %p191
      %p193 = pneg %p192
      // Predicated region
      $region63: #{traffic_model_forward.1} parent=5 // pred_check
        _
      $region64: #{traffic_model_forward.1} parent=5 // pred_check_branch
        %195 = sbr.rel (%p192) target = $region66
      $region65: #{traffic_model_forward.1} parent=5 // pred_region
        %s196 = ssub.s32 %s11, 1
        %s197 = sand.u32 %s24, 1
        %s198 = sand.u32 %s24, 1
        %s199 = smul.addr %s198, 16
        %s200 = scalar_lea.vmem [#allocation2], %s199
        // Predicated region
        $region67: #{traffic_model_forward.1} parent=65 // pred_check
          %p201 = pneg %p37
        $region68: #{traffic_model_forward.1} parent=65 // pred_check_branch
          %203 = sbr.rel (%p201) target = $region70
        $region69: #{traffic_model_forward.1} parent=65 // pred_region
          _
        $region70: #{traffic_model_forward.1} parent=65 // pred_fallthru
          _
        // Predicated region
        $region71: #{traffic_model_forward.1} parent=65 // pred_check
          %p204 = pneg %p58
        $region72: #{traffic_model_forward.1} parent=65 // pred_check_branch
          %206 = sbr.rel (%p204) target = $region74
        $region73: #{traffic_model_forward.1} parent=65 // pred_region
          %208 = dma.done [#allocation4], 16
        $region74: #{traffic_model_forward.1} parent=65 // pred_fallthru
          _
        // Predicated region
        $region75: #{traffic_model_forward.1} parent=65 // pred_check
          %p209 = pneg %p79
        $region76: #{traffic_model_forward.1} parent=65 // pred_check_branch
          %211 = sbr.rel (%p209) target = $region78
        $region77: #{traffic_model_forward.1} parent=65 // pred_region
          %213 = dma.done [#allocation6], 16
        $region78: #{traffic_model_forward.1} parent=65 // pred_fallthru
          _
        %214 = sfence
        %s215 = sand.u32 %s24, 1
        %s216 = sand.u32 %s24, 1
        %s217 = smul.addr %s216, 16
        %s218 = scalar_lea.vmem [#allocation2], %s217
        %p219 = pneg %p37
        %p220 = pneg %p34
        %p221 = pneg %p58
        %p222 = pneg %p55
        %p223 = pneg %p79
        %p224 = pneg %p76
        %p225 = pneg %p105
        %p226 = pneg %p102
        %s227 = sand.u32 %s92, 1
        %s228 = sand.u32 %s92, 1
        %s229 = smul.addr %s228, 16
        %s230 = scalar_lea.vmem [#allocation7], %s229
        %s231 = sld [smem:[#allocation3]]
        %s232 = sld [smem:[#allocation3 + $0x1]]
        %s233 = sld [smem:[#allocation3 + $0x2]]
        %s234 = sld [smem:[#allocation3 + $0x3]]
        %s235 = sld [smem:[#allocation5]]
        %s236 = sld [smem:[#allocation5 + $0x1]]
        %v237 = vld [vmem:[%s200] sm:$0xff]
        %v238 = vstv %s231
        %v239 = vmul.f32 %v237, %v238
        %s240 = scalar_lea.vmem %s200, 8 [#allocation2]
        %v241 = vld [vmem:[%s240] sm:$0xff]
        %v242 = vstv %s233
        %v243 = vmul.f32 %v241, %v242
        %v244 = vadd.f32 %v239, %v243
        %v245 = vstv %s235
        %v246 = vadd.f32 %v244, %v245
        %247 = vst [vmem:[%s230] sm:$0xff] %v246
        %v248 = vld [vmem:[%s200] sm:$0xff]
        %v249 = vstv %s232
        %v250 = vmul.f32 %v248, %v249
        %v251 = vld [vmem:[%s240] sm:$0xff]
        %v252 = vstv %s234
        %v253 = vmul.f32 %v251, %v252
        %v254 = vadd.f32 %v250, %v253
        %v255 = vstv %s236
        %v256 = vadd.f32 %v254, %v255
        %s257 = scalar_lea.vmem %s230, 8 [#allocation7]
        %258 = vst [vmem:[%s257] sm:$0xff] %v256
        %s259 = sand.u32 %s92, 1
        %s260 = sand.u32 %s92, 1
        %s261 = smul.addr %s260, 16
        %s262 = scalar_lea.vmem [#allocation7], %s261
        // Predicated region
        $region79: #{traffic_model_forward.1} parent=65 // pred_check
          %p263 = pneg %p102
        $region80: #{traffic_model_forward.1} parent=65 // pred_check_branch
          %265 = sbr.rel (%p263) target = $region82
        $region81: #{traffic_model_forward.1} parent=65 // pred_region
          %s266 = smul.addr %s16, 8
          %s267 = scalar_lea.vmem %s3, %s266
          // Predicated region
          $region83: #{traffic_model_forward.1} parent=81 // pred_check
            _
          $region84: #{traffic_model_forward.1} parent=81 // pred_check_branch
            %269 = sbr.rel (0) target = $region86
          $region85: #{traffic_model_forward.1} parent=81 // pred_region
            // Predicated region
            $region87: #{traffic_model_forward.1} parent=85 // pred_check
              _
            $region88: #{traffic_model_forward.1} parent=85 // pred_check_branch
              %271 = sbr.rel (0) target = $region90
            $region89: #{traffic_model_forward.1} parent=85 // pred_region
              // Predicated region
              $region102: #{traffic_model_forward.1} parent=89 // pred_check
                _
              $region103: #{traffic_model_forward.1} parent=89 // pred_check_branch
                %289 = sbr.rel (0) target = $region105
              $region104: #{traffic_model_forward.1} parent=89 // pred_region
                loop: start=0, step=1, limit=1
                $region106: #{traffic_model_forward.1} parent=104 // loop_pre_header
                  _
                $region107: #{traffic_model_forward.1} parent=104 // loop_header
                  %s291 = sphi 0, %s295
                  %p292 = scmp.ge.s32.totalorder %s291, 1
                  %s296 = sphi %s262, %s262
                  %s297 = sphi %s267, %s267
                $region108: #{traffic_model_forward.1} parent=104 // loop_header_branch
                  %294 = sbr.rel (%p292) target = $region112
                $region109: #{traffic_model_forward.1} parent=104 // loop_body
                  %v298 = vld [vmem:[%s296] sm:$0xff]
                  %299 = vst [vmem:[%s297] sm:$0xff] %v298
                  %v300 = vld [vmem:[%s296 + $0x8] sm:$0xff]
                  %301 = vst [vmem:[%s297 + $0x20] sm:$0xff] %v300
                $region110: #{traffic_model_forward.1} parent=104 // loop_footer
                  %s295 = sadd.s32 1, %s291
                $region111: #{traffic_model_forward.1} parent=104 // loop_footer_branch
                  %290 = sbr.rel target = $region107
                $region112: #{traffic_model_forward.1} parent=104 // loop_exit
                  _
              $region105: #{traffic_model_forward.1} parent=89 // pred_fallthru
                _
              // Predicated region
              $region113: #{traffic_model_forward.1} parent=89 // pred_check
                _
              $region114: #{traffic_model_forward.1} parent=89 // pred_check_branch
                %303 = sbr.rel target = $region116
              $region115: #{traffic_model_forward.1} parent=89 // pred_region
                _
              $region116: #{traffic_model_forward.1} parent=89 // pred_fallthru
                _
            $region90: #{traffic_model_forward.1} parent=85 // pred_fallthru
              _
            // Predicated region
            $region91: #{traffic_model_forward.1} parent=85 // pred_check
              _
            $region92: #{traffic_model_forward.1} parent=85 // pred_check_branch
              %273 = sbr.rel target = $region94
            $region93: #{traffic_model_forward.1} parent=85 // pred_region
              %s275 = ssub.s32 256, 1
              loop: start=0, step=1, limit=1
              $region95: #{traffic_model_forward.1} parent=93 // loop_pre_header
                _
              $region96: #{traffic_model_forward.1} parent=93 // loop_header
                %s277 = sphi 0, %s281
                %p278 = scmp.ge.s32.totalorder %s277, 1
                %s282 = sphi %s262, %s262
                %s283 = sphi %s267, %s267
              $region97: #{traffic_model_forward.1} parent=93 // loop_header_branch
                %280 = sbr.rel (%p278) target = $region101
              $region98: #{traffic_model_forward.1} parent=93 // loop_body
                %v284 = vld [vmem:[%s282] sm:%s275]
                %285 = vst [vmem:[%s283] sm:%s275] %v284
                %v286 = vld [vmem:[%s282 + $0x8] sm:%s275]
                %287 = vst [vmem:[%s283 + $0x20] sm:%s275] %v286
              $region99: #{traffic_model_forward.1} parent=93 // loop_footer
                %s281 = sadd.s32 1, %s277
              $region100: #{traffic_model_forward.1} parent=93 // loop_footer_branch
                %276 = sbr.rel target = $region96
              $region101: #{traffic_model_forward.1} parent=93 // loop_exit
                _
            $region94: #{traffic_model_forward.1} parent=85 // pred_fallthru
              _
          $region86: #{traffic_model_forward.1} parent=81 // pred_fallthru
            _
          %304 = vnop
        $region82: #{traffic_model_forward.1} parent=65 // pred_fallthru
          _
      $region66: #{traffic_model_forward.1} parent=5 // pred_fallthru
        _
      %p305 = scmp.le.s32.totalorder 2, %s11
      // Predicated region
      $region117: #{traffic_model_forward.1} parent=5 // pred_check
        %p306 = pneg %p305
      $region118: #{traffic_model_forward.1} parent=5 // pred_check_branch
        %308 = sbr.rel (%p306) target = $region120
      $region119: #{traffic_model_forward.1} parent=5 // pred_region
        %s309 = ssub.s32 %s11, 2
        // Predicated region
        $region121: #{traffic_model_forward.1} parent=119 // pred_check
          %p310 = pneg %p108
        $region122: #{traffic_model_forward.1} parent=119 // pred_check_branch
          %312 = sbr.rel (%p310) target = $region124
        $region123: #{traffic_model_forward.1} parent=119 // pred_region
          %s313 = sand.u32 %s93, 1
          %s314 = sand.u32 %s93, 1
          %s315 = smul.addr %s314, 16
          %s316 = scalar_lea.vmem [#allocation7], %s315
        $region124: #{traffic_model_forward.1} parent=119 // pred_fallthru
          _
      $region120: #{traffic_model_forward.1} parent=5 // pred_fallthru
        _
    $region6: #{traffic_model_forward.1} parent=1 // loop_footer
      %s15 = sadd.s32 1, %s11
    $region7: #{traffic_model_forward.1} parent=1 // loop_footer_branch
      %10 = sbr.rel target = $region3
    $region8: #{traffic_model_forward.1} parent=1 // loop_exit
      _
    %317 = vsyncpa [#allocation4], 1
    %s318 = scalar_lea.sflag [#allocation4], 1
    %319 = vsyncpa %s318, 1
    %320 = vsyncpa [#allocation6], 1

</llo_original>
